<compile_context>
chip_gen: v6e
topology: v6e:2x2x1
jax: 0.10.0
libtpu: 0.0.40
codegen_flags: <defaults>
</compile_context>

<pallas_src>
import functools

import numpy as np
import jax
import jax.numpy as jnp
from jax.experimental import pallas as pl
from jax.experimental.pallas import tpu as pltpu


def _round_up(x, m):
    return ((x + m - 1) // m) * m


def gru_recurrence_kernel(gi_ref, w_hh_ref, b_hn_ref, out_ref, h_ref,
                          *, seq, t_chunk, hid):
    """Serial GRU recurrence over one time chunk for one batch tile.

    gi_ref  : (t_chunk, tile_b, G)  precomputed x@W_ih^T + folded biases,
                                    gates packed at cols [0:H),[H:2H),[2H:3H)
    w_hh_ref: (hid, G)              hidden->gates weights (single MXU tile)
    b_hn_ref: (1, G)                b_hh of the n gate only (inside r * (.))
    out_ref : (tile_b, hid)         final hidden state h_T
    h_ref   : (tile_b, hid) VMEM f32 scratch, carried across time chunks
    """
    t_idx = pl.program_id(1)
    n_chunks = pl.num_programs(1)
    tile_b = h_ref.shape[0]

    @pl.when(t_idx == 0)
    def _():
        h_ref[...] = jnp.zeros_like(h_ref)          # h0 == 0

    # Loaded once per chunk; identical RHS of every unrolled jnp.dot below
    # (single (hid, 128) tile), so Mosaic can keep it staged on the MXU.
    w_hh = w_hh_ref[...].astype(jnp.float32)
    b_hn = b_hn_ref[...]                            # (1, G): implicit broadcast

    h = h_ref[...]
    needs_mask = (seq % t_chunk) != 0               # static

    # Statically unrolled inner time loop over the chunk.
    for lt in range(t_chunk):
        gi = gi_ref[lt]                             # (tile_b, G)
        gh = jnp.dot(h, w_hh, preferred_element_type=jnp.float32) + b_hn
        # PyTorch gate order (r, z, n); 32-lane sub-vreg slices overlap the MXU.
        r = jax.nn.sigmoid(gi[:, 0 * hid:1 * hid] + gh[:, 0 * hid:1 * hid])
        z = jax.nn.sigmoid(gi[:, 1 * hid:2 * hid] + gh[:, 1 * hid:2 * hid])
        n = jnp.tanh(gi[:, 2 * hid:3 * hid] + r * gh[:, 2 * hid:3 * hid])
        h_new = (1.0 - z) * n + z * h
        if needs_mask:
            valid = (t_idx * t_chunk + lt) < seq    # only pad steps discarded
            h_new = jnp.where(valid, h_new, h)
        h = h_new

    h_ref[...] = h                                  # carry to next chunk

    @pl.when(t_idx == n_chunks - 1)
    def _():
        out_ref[...] = h


def question_embedding_forward(x, w_ih, w_hh, b_ih, b_hh, *,
                               tile_b=None, min_batch_tiles=1, t_chunk=32,
                               storage_dtype=jnp.float32):
    """x: (batch, seq, in_dim), batch-first (PyTorch convention).

    w_ih: (3H, in_dim), w_hh: (3H, H), b_ih/b_hh: (3H,) — PyTorch GRU layout,
    gate order (r, z, n).  Returns (batch, H) == output[:, -1] == h_T.

    min_batch_tiles=2 is recommended on v7x (2 TensorCores); 1 on v5e/v6e.
    storage_dtype=jnp.bfloat16 halves gi DMA/VMEM (h / accumulation stay f32).
    """
    batch, seq, in_dim = x.shape
    hid = w_hh.shape[1]
    assert w_ih.shape == (3 * hid, in_dim)
    f32 = jnp.float32

    w_ih = w_ih.astype(f32)
    w_hh = w_hh.astype(f32)
    b_ih = b_ih.astype(f32)
    b_hh = b_hh.astype(f32)

    G = _round_up(3 * hid, 128)                     # packed, lane-aligned gates

    # ---- batch tiling: big tiles to fill the MXU/EUP, bounded at 256 rows ----
    b8 = _round_up(batch, 8)
    if tile_b is None:
        n_tiles = max(min_batch_tiles, -(-b8 // 256))
        tile_b = _round_up(-(-b8 // n_tiles), 8)
    batch_pad = _round_up(b8, tile_b)

    # ---- time chunking ----
    t_chunk = max(1, min(t_chunk, seq))
    seq_pad = _round_up(seq, t_chunk)

    # ---- hoisted input projection, produced directly in the padded layout ----
    # Fold b_ih fully plus b_hh for the r and z gates; only the n gate's b_hh
    # must stay with the hidden term (it sits inside the r * (.) product).
    b_gi = jnp.zeros((G,), f32).at[:3 * hid].set(b_ih)
    b_gi = b_gi.at[:2 * hid].add(b_hh[:2 * hid])
    w_ih_p = jnp.zeros((G, in_dim), f32).at[:3 * hid, :].set(w_ih)

    # Pad x (the small tensor) instead of gi; pad time steps are masked in-kernel.
    x_p = jnp.pad(x.astype(f32),
                  ((0, batch_pad - batch), (0, seq_pad - seq), (0, 0)))
    gi = jnp.einsum("bsi,gi->sbg", x_p, w_ih_p,
                    preferred_element_type=f32) + b_gi      # (seq_pad, B_pad, G)
    gi = gi.astype(storage_dtype)

    # Hidden->gates weights packed into a single (hid, G) MXU tile.
    w_hh_p = jnp.zeros((hid, G), f32).at[:, :3 * hid].set(w_hh.T)
    w_hh_p = w_hh_p.astype(storage_dtype)

    # b_hh of the n gate only, lane-aligned in the packed layout.
    b_hn = jnp.zeros((1, G), f32).at[0, 2 * hid:3 * hid].set(b_hh[2 * hid:])

    grid = (batch_pad // tile_b, seq_pad // t_chunk)

    # VMEM budget: double-buffered gi chunk dominates; leave headroom, cap well
    # under v7x's 64 MiB physical VMEM.
    gi_block_bytes = t_chunk * tile_b * G * jnp.dtype(storage_dtype).itemsize
    vmem_limit = int(min(max(4 * gi_block_bytes + (4 << 20), 16 << 20), 48 << 20))

    kernel = functools.partial(gru_recurrence_kernel,
                               seq=seq, t_chunk=t_chunk, hid=hid)

    out = pl.pallas_call(
        kernel,
        out_shape=jax.ShapeDtypeStruct((batch_pad, hid), f32),
        grid_spec=pltpu.PrefetchScalarGridSpec(
            num_scalar_prefetch=0,
            grid=grid,
            in_specs=[
                pl.BlockSpec((t_chunk, tile_b, G), lambda b, t: (t, b, 0)),
                pl.BlockSpec((hid, G), lambda b, t: (0, 0)),
                pl.BlockSpec((1, G), lambda b, t: (0, 0)),
            ],
            out_specs=pl.BlockSpec((tile_b, hid), lambda b, t: (b, 0)),
            scratch_shapes=[pltpu.VMEM((tile_b, hid), f32)],
        ),
        compiler_params=pltpu.CompilerParams(
            dimension_semantics=("parallel", "arbitrary"),
            vmem_limit_bytes=vmem_limit),
    )(gi, w_hh_p, b_hn)

    return out[:batch]


def gru_reference(x, w_ih, w_hh, b_ih, b_hh):
    """Pure-JAX reference mirroring torch.nn.GRU (batch_first, h0 = 0)."""
    batch, seq, _ = x.shape
    H = w_hh.shape[1]
    h = jnp.zeros((batch, H), jnp.float32)
    for t in range(seq):
        x_t = x[:, t, :]
        gi = x_t @ w_ih.T + b_ih
        gh = h @ w_hh.T + b_hh
        r = jax.nn.sigmoid(gi[:, :H] + gh[:, :H])
        z = jax.nn.sigmoid(gi[:, H:2 * H] + gh[:, H:2 * H])
        n = jnp.tanh(gi[:, 2 * H:] + r * gh[:, 2 * H:])
        h = (1.0 - z) * n + z * h
    return h


if __name__ == "__main__":
    # Module config: QuestionEmbedding(in_dim=16, num_hid=32, nlayers=1,
    #                                  bidirect=False, dropout=0.0, rnn_type='GRU')
    in_dim, num_hid = 16, 32

    key = jax.random.PRNGKey(0)
    k_x, k_wih, k_whh, k_bih, k_bhh, k_x2 = jax.random.split(key, 6)

    # Deterministic parameter init, uniform(-1/sqrt(H), 1/sqrt(H)) like PyTorch.
    scale = 1.0 / np.sqrt(num_hid)
    w_ih = jax.random.uniform(k_wih, (3 * num_hid, in_dim), jnp.float32, -scale, scale)
    w_hh = jax.random.uniform(k_whh, (3 * num_hid, num_hid), jnp.float32, -scale, scale)
    b_ih = jax.random.uniform(k_bih, (3 * num_hid,), jnp.float32, -scale, scale)
    b_hh = jax.random.uniform(k_bhh, (3 * num_hid,), jnp.float32, -scale, scale)

    # Case 1: nominal small config (batch=2, seq=8), f32 storage.
    batch, seq = 2, 8
    x = jax.random.normal(k_x, (batch, seq, in_dim), jnp.float32)
    out = jax.block_until_ready(question_embedding_forward(x, w_ih, w_hh, b_ih, b_hh))
    ref = gru_reference(x, w_ih, w_hh, b_ih, b_hh)
    np.testing.assert_allclose(np.asarray(out), np.asarray(ref), rtol=1e-5, atol=1e-5)
    assert out.shape == (batch, num_hid)

    # Case 2: ragged shapes exercising batch padding, time chunking and masking.
    batch2, seq2 = 5, 13
    x2 = jax.random.normal(k_x2, (batch2, seq2, in_dim), jnp.float32)
    out2 = jax.block_until_ready(
        question_embedding_forward(x2, w_ih, w_hh, b_ih, b_hh, t_chunk=4))
    ref2 = gru_reference(x2, w_ih, w_hh, b_ih, b_hh)
    np.testing.assert_allclose(np.asarray(out2), np.asarray(ref2), rtol=1e-5, atol=1e-5)
    assert out2.shape == (batch2, num_hid)

    # Case 3: bf16 storage for gi / W_hh (halves DMA/VMEM); looser tolerance.
    out3 = jax.block_until_ready(
        question_embedding_forward(x, w_ih, w_hh, b_ih, b_hh,
                                   storage_dtype=jnp.bfloat16))
    np.testing.assert_allclose(np.asarray(out3), np.asarray(ref), rtol=5e-2, atol=5e-2)

    print("KERNEL_OK")
</pallas_src>

<mosaic_0001>
module attributes {stable_mosaic.version = 11 : i64} {
  func.func @gru_recurrence_kernel(%arg0: i32, %arg1: i32, %arg2: memref<8x8x128xf32, #tpu.memory_space<vmem>>, %arg3: memref<32x128xf32, #tpu.memory_space<vmem>>, %arg4: memref<1x128xf32, #tpu.memory_space<vmem>>, %arg5: memref<8x32xf32, #tpu.memory_space<vmem>>, %arg6: memref<8x32xf32, #tpu.memory_space<vmem>>) attributes {dimension_semantics = [#tpu.dimension_semantics<parallel>, #tpu.dimension_semantics<arbitrary>], iteration_bounds = array<i64: 1, 1>, scalar_prefetch = 0 : i64, scratch_operands = 1 : i64, tpu.core_type = #tpu.core_type<tc>, window_params = [{transform_indices = @transform_0, window_bounds = array<i64: 8, 8, 128>}, {pipeline_mode = #tpu.pipeline_mode<synchronous>, transform_indices = @transform_1, window_bounds = array<i64: 32, 128>}, {pipeline_mode = #tpu.pipeline_mode<synchronous>, transform_indices = @transform_2, window_bounds = array<i64: 1, 128>}, {transform_indices = @transform_3, window_bounds = array<i64: 8, 32>}]} {
    %c0_i32 = arith.constant 0 : i32
    %0 = arith.cmpi eq, %arg1, %c0_i32 : i32
    %1 = arith.extui %0 : i1 to i32
    %c0_i32_0 = arith.constant 0 : i32
    %2 = arith.cmpi ne, %1, %c0_i32_0 : i32
    scf.if %2 {
      %cst_58 = arith.constant 0.000000e+00 : f32
      %258 = vector.broadcast %cst_58 : f32 to vector<8x32xf32>
      %c0_59 = arith.constant 0 : index
      %c0_60 = arith.constant 0 : index
      %259 = vector.load %arg6[%c0_59, %c0_60] : memref<8x32xf32, #tpu.memory_space<vmem>>, vector<8x32xf32>
      tpu.vector_store %arg6[%c0_59, %c0_60], %258 {strides = array<i32>} : memref<8x32xf32, #tpu.memory_space<vmem>>, vector<8x32xf32>,
    } else {
    }
    %c0 = arith.constant 0 : index
    %c0_1 = arith.constant 0 : index
    %3 = vector.load %arg3[%c0, %c0_1] : memref<32x128xf32, #tpu.memory_space<vmem>>, vector<32x128xf32>
    %c0_2 = arith.constant 0 : index
    %c0_3 = arith.constant 0 : index
    %4 = vector.load %arg4[%c0_2, %c0_3] : memref<1x128xf32, #tpu.memory_space<vmem>>, vector<1x128xf32>
    %c0_4 = arith.constant 0 : index
    %c0_5 = arith.constant 0 : index
    %5 = vector.load %arg6[%c0_4, %c0_5] : memref<8x32xf32, #tpu.memory_space<vmem>>, vector<8x32xf32>
    %c0_6 = arith.constant 0 : index
    %c0_7 = arith.constant 0 : index
    %c0_8 = arith.constant 0 : index
    %6 = vector.load %arg2[%c0_6, %c0_7, %c0_8] : memref<8x8x128xf32, #tpu.memory_space<vmem>>, vector<1x8x128xf32>
    %7 = vector.shape_cast %6 : vector<1x8x128xf32> to vector<8x128xf32>
    %cst = arith.constant dense<0.000000e+00> : vector<8x128xf32>
    %8 = tpu.matmul %5, %3, %cst {dimension_numbers = #tpu.dot_dimension_numbers<[1], [0], [0], [1], [0, 0, 1, 1], [], []>} : vector<8x32xf32>, vector<32x128xf32>, vector<8x128xf32> -> vector<8x128xf32>
    %9 = vector.broadcast %4 : vector<1x128xf32> to vector<8x128xf32>
    %10 = arith.addf %8, %9 : vector<8x128xf32>
    %11 = vector.extract_strided_slice %7 {offsets = [0, 0], sizes = [8, 32], strides = [1, 1]} : vector<8x128xf32> to vector<8x32xf32>
    %12 = vector.extract_strided_slice %10 {offsets = [0, 0], sizes = [8, 32], strides = [1, 1]} : vector<8x128xf32> to vector<8x32xf32>
    %13 = arith.addf %11, %12 : vector<8x32xf32>
    %14 = arith.negf %13 : vector<8x32xf32>
    %15 = math.exp %14 : vector<8x32xf32>
    %cst_9 = arith.constant 1.000000e+00 : f32
    %16 = vector.broadcast %cst_9 : f32 to vector<8x32xf32>
    %17 = arith.addf %16, %15 : vector<8x32xf32>
    %18 = arith.divf %16, %17 : vector<8x32xf32>
    %19 = vector.extract_strided_slice %7 {offsets = [0, 32], sizes = [8, 32], strides = [1, 1]} : vector<8x128xf32> to vector<8x32xf32>
    %20 = vector.extract_strided_slice %10 {offsets = [0, 32], sizes = [8, 32], strides = [1, 1]} : vector<8x128xf32> to vector<8x32xf32>
    %21 = arith.addf %19, %20 : vector<8x32xf32>
    %22 = arith.negf %21 : vector<8x32xf32>
    %23 = math.exp %22 : vector<8x32xf32>
    %cst_10 = arith.constant 1.000000e+00 : f32
    %24 = vector.broadcast %cst_10 : f32 to vector<8x32xf32>
    %25 = arith.addf %24, %23 : vector<8x32xf32>
    %26 = arith.divf %24, %25 : vector<8x32xf32>
    %27 = vector.extract_strided_slice %7 {offsets = [0, 64], sizes = [8, 32], strides = [1, 1]} : vector<8x128xf32> to vector<8x32xf32>
    %28 = vector.extract_strided_slice %10 {offsets = [0, 64], sizes = [8, 32], strides = [1, 1]} : vector<8x128xf32> to vector<8x32xf32>
    %29 = arith.mulf %18, %28 : vector<8x32xf32>
    %30 = arith.addf %27, %29 : vector<8x32xf32>
    %31 = math.tanh %30 : vector<8x32xf32>
    %cst_11 = arith.constant 1.000000e+00 : f32
    %32 = vector.broadcast %cst_11 : f32 to vector<8x32xf32>
    %33 = arith.subf %32, %26 : vector<8x32xf32>
    %34 = arith.mulf %33, %31 : vector<8x32xf32>
    %35 = arith.mulf %26, %5 : vector<8x32xf32>
    %36 = arith.addf %34, %35 : vector<8x32xf32>
    %c1 = arith.constant 1 : index
    %c0_12 = arith.constant 0 : index
    %c0_13 = arith.constant 0 : index
    %37 = vector.load %arg2[%c1, %c0_12, %c0_13] : memref<8x8x128xf32, #tpu.memory_space<vmem>>, vector<1x8x128xf32>
    %38 = vector.shape_cast %37 : vector<1x8x128xf32> to vector<8x128xf32>
    %cst_14 = arith.constant dense<0.000000e+00> : vector<8x128xf32>
    %39 = tpu.matmul %36, %3, %cst_14 {dimension_numbers = #tpu.dot_dimension_numbers<[1], [0], [0], [1], [0, 0, 1, 1], [], []>} : vector<8x32xf32>, vector<32x128xf32>, vector<8x128xf32> -> vector<8x128xf32>
    %40 = vector.broadcast %4 : vector<1x128xf32> to vector<8x128xf32>
    %41 = arith.addf %39, %40 : vector<8x128xf32>
    %42 = vector.extract_strided_slice %38 {offsets = [0, 0], sizes = [8, 32], strides = [1, 1]} : vector<8x128xf32> to vector<8x32xf32>
    %43 = vector.extract_strided_slice %41 {offsets = [0, 0], sizes = [8, 32], strides = [1, 1]} : vector<8x128xf32> to vector<8x32xf32>
    %44 = arith.addf %42, %43 : vector<8x32xf32>
    %45 = arith.negf %44 : vector<8x32xf32>
    %46 = math.exp %45 : vector<8x32xf32>
    %cst_15 = arith.constant 1.000000e+00 : f32
    %47 = vector.broadcast %cst_15 : f32 to vector<8x32xf32>
    %48 = arith.addf %47, %46 : vector<8x32xf32>
    %49 = arith.divf %47, %48 : vector<8x32xf32>
    %50 = vector.extract_strided_slice %38 {offsets = [0, 32], sizes = [8, 32], strides = [1, 1]} : vector<8x128xf32> to vector<8x32xf32>
    %51 = vector.extract_strided_slice %41 {offsets = [0, 32], sizes = [8, 32], strides = [1, 1]} : vector<8x128xf32> to vector<8x32xf32>
    %52 = arith.addf %50, %51 : vector<8x32xf32>
    %53 = arith.negf %52 : vector<8x32xf32>
    %54 = math.exp %53 : vector<8x32xf32>
    %cst_16 = arith.constant 1.000000e+00 : f32
    %55 = vector.broadcast %cst_16 : f32 to vector<8x32xf32>
    %56 = arith.addf %55, %54 : vector<8x32xf32>
    %57 = arith.divf %55, %56 : vector<8x32xf32>
    %58 = vector.extract_strided_slice %38 {offsets = [0, 64], sizes = [8, 32], strides = [1, 1]} : vector<8x128xf32> to vector<8x32xf32>
    %59 = vector.extract_strided_slice %41 {offsets = [0, 64], sizes = [8, 32], strides = [1, 1]} : vector<8x128xf32> to vector<8x32xf32>
    %60 = arith.mulf %49, %59 : vector<8x32xf32>
    %61 = arith.addf %58, %60 : vector<8x32xf32>
    %62 = math.tanh %61 : vector<8x32xf32>
    %cst_17 = arith.constant 1.000000e+00 : f32
    %63 = vector.broadcast %cst_17 : f32 to vector<8x32xf32>
    %64 = arith.subf %63, %57 : vector<8x32xf32>
    %65 = arith.mulf %64, %62 : vector<8x32xf32>
    %66 = arith.mulf %57, %36 : vector<8x32xf32>
    %67 = arith.addf %65, %66 : vector<8x32xf32>
    %c2 = arith.constant 2 : index
    %c0_18 = arith.constant 0 : index
    %c0_19 = arith.constant 0 : index
    %68 = vector.load %arg2[%c2, %c0_18, %c0_19] : memref<8x8x128xf32, #tpu.memory_space<vmem>>, vector<1x8x128xf32>
    %69 = vector.shape_cast %68 : vector<1x8x128xf32> to vector<8x128xf32>
    %cst_20 = arith.constant dense<0.000000e+00> : vector<8x128xf32>
    %70 = tpu.matmul %67, %3, %cst_20 {dimension_numbers = #tpu.dot_dimension_numbers<[1], [0], [0], [1], [0, 0, 1, 1], [], []>} : vector<8x32xf32>, vector<32x128xf32>, vector<8x128xf32> -> vector<8x128xf32>
    %71 = vector.broadcast %4 : vector<1x128xf32> to vector<8x128xf32>
    %72 = arith.addf %70, %71 : vector<8x128xf32>
    %73 = vector.extract_strided_slice %69 {offsets = [0, 0], sizes = [8, 32], strides = [1, 1]} : vector<8x128xf32> to vector<8x32xf32>
    %74 = vector.extract_strided_slice %72 {offsets = [0, 0], sizes = [8, 32], strides = [1, 1]} : vector<8x128xf32> to vector<8x32xf32>
    %75 = arith.addf %73, %74 : vector<8x32xf32>
    %76 = arith.negf %75 : vector<8x32xf32>
    %77 = math.exp %76 : vector<8x32xf32>
    %cst_21 = arith.constant 1.000000e+00 : f32
    %78 = vector.broadcast %cst_21 : f32 to vector<8x32xf32>
    %79 = arith.addf %78, %77 : vector<8x32xf32>
    %80 = arith.divf %78, %79 : vector<8x32xf32>
    %81 = vector.extract_strided_slice %69 {offsets = [0, 32], sizes = [8, 32], strides = [1, 1]} : vector<8x128xf32> to vector<8x32xf32>
    %82 = vector.extract_strided_slice %72 {offsets = [0, 32], sizes = [8, 32], strides = [1, 1]} : vector<8x128xf32> to vector<8x32xf32>
    %83 = arith.addf %81, %82 : vector<8x32xf32>
    %84 = arith.negf %83 : vector<8x32xf32>
    %85 = math.exp %84 : vector<8x32xf32>
    %cst_22 = arith.constant 1.000000e+00 : f32
    %86 = vector.broadcast %cst_22 : f32 to vector<8x32xf32>
    %87 = arith.addf %86, %85 : vector<8x32xf32>
    %88 = arith.divf %86, %87 : vector<8x32xf32>
    %89 = vector.extract_strided_slice %69 {offsets = [0, 64], sizes = [8, 32], strides = [1, 1]} : vector<8x128xf32> to vector<8x32xf32>
    %90 = vector.extract_strided_slice %72 {offsets = [0, 64], sizes = [8, 32], strides = [1, 1]} : vector<8x128xf32> to vector<8x32xf32>
    %91 = arith.mulf %80, %90 : vector<8x32xf32>
    %92 = arith.addf %89, %91 : vector<8x32xf32>
    %93 = math.tanh %92 : vector<8x32xf32>
    %cst_23 = arith.constant 1.000000e+00 : f32
    %94 = vector.broadcast %cst_23 : f32 to vector<8x32xf32>
    %95 = arith.subf %94, %88 : vector<8x32xf32>
    %96 = arith.mulf %95, %93 : vector<8x32xf32>
    %97 = arith.mulf %88, %67 : vector<8x32xf32>
    %98 = arith.addf %96, %97 : vector<8x32xf32>
    %c3 = arith.constant 3 : index
    %c0_24 = arith.constant 0 : index
    %c0_25 = arith.constant 0 : index
    %99 = vector.load %arg2[%c3, %c0_24, %c0_25] : memref<8x8x128xf32, #tpu.memory_space<vmem>>, vector<1x8x128xf32>
    %100 = vector.shape_cast %99 : vector<1x8x128xf32> to vector<8x128xf32>
    %cst_26 = arith.constant dense<0.000000e+00> : vector<8x128xf32>
    %101 = tpu.matmul %98, %3, %cst_26 {dimension_numbers = #tpu.dot_dimension_numbers<[1], [0], [0], [1], [0, 0, 1, 1], [], []>} : vector<8x32xf32>, vector<32x128xf32>, vector<8x128xf32> -> vector<8x128xf32>
    %102 = vector.broadcast %4 : vector<1x128xf32> to vector<8x128xf32>
    %103 = arith.addf %101, %102 : vector<8x128xf32>
    %104 = vector.extract_strided_slice %100 {offsets = [0, 0], sizes = [8, 32], strides = [1, 1]} : vector<8x128xf32> to vector<8x32xf32>
    %105 = vector.extract_strided_slice %103 {offsets = [0, 0], sizes = [8, 32], strides = [1, 1]} : vector<8x128xf32> to vector<8x32xf32>
    %106 = arith.addf %104, %105 : vector<8x32xf32>
    %107 = arith.negf %106 : vector<8x32xf32>
    %108 = math.exp %107 : vector<8x32xf32>
    %cst_27 = arith.constant 1.000000e+00 : f32
    %109 = vector.broadcast %cst_27 : f32 to vector<8x32xf32>
    %110 = arith.addf %109, %108 : vector<8x32xf32>
    %111 = arith.divf %109, %110 : vector<8x32xf32>
    %112 = vector.extract_strided_slice %100 {offsets = [0, 32], sizes = [8, 32], strides = [1, 1]} : vector<8x128xf32> to vector<8x32xf32>
    %113 = vector.extract_strided_slice %103 {offsets = [0, 32], sizes = [8, 32], strides = [1, 1]} : vector<8x128xf32> to vector<8x32xf32>
    %114 = arith.addf %112, %113 : vector<8x32xf32>
    %115 = arith.negf %114 : vector<8x32xf32>
    %116 = math.exp %115 : vector<8x32xf32>
    %cst_28 = arith.constant 1.000000e+00 : f32
    %117 = vector.broadcast %cst_28 : f32 to vector<8x32xf32>
    %118 = arith.addf %117, %116 : vector<8x32xf32>
    %119 = arith.divf %117, %118 : vector<8x32xf32>
    %120 = vector.extract_strided_slice %100 {offsets = [0, 64], sizes = [8, 32], strides = [1, 1]} : vector<8x128xf32> to vector<8x32xf32>
    %121 = vector.extract_strided_slice %103 {offsets = [0, 64], sizes = [8, 32], strides = [1, 1]} : vector<8x128xf32> to vector<8x32xf32>
    %122 = arith.mulf %111, %121 : vector<8x32xf32>
    %123 = arith.addf %120, %122 : vector<8x32xf32>
    %124 = math.tanh %123 : vector<8x32xf32>
    %cst_29 = arith.constant 1.000000e+00 : f32
    %125 = vector.broadcast %cst_29 : f32 to vector<8x32xf32>
    %126 = arith.subf %125, %119 : vector<8x32xf32>
    %127 = arith.mulf %126, %124 : vector<8x32xf32>
    %128 = arith.mulf %119, %98 : vector<8x32xf32>
    %129 = arith.addf %127, %128 : vector<8x32xf32>
    %c4 = arith.constant 4 : index
    %c0_30 = arith.constant 0 : index
    %c0_31 = arith.constant 0 : index
    %130 = vector.load %arg2[%c4, %c0_30, %c0_31] : memref<8x8x128xf32, #tpu.memory_space<vmem>>, vector<1x8x128xf32>
    %131 = vector.shape_cast %130 : vector<1x8x128xf32> to vector<8x128xf32>
    %cst_32 = arith.constant dense<0.000000e+00> : vector<8x128xf32>
    %132 = tpu.matmul %129, %3, %cst_32 {dimension_numbers = #tpu.dot_dimension_numbers<[1], [0], [0], [1], [0, 0, 1, 1], [], []>} : vector<8x32xf32>, vector<32x128xf32>, vector<8x128xf32> -> vector<8x128xf32>
    %133 = vector.broadcast %4 : vector<1x128xf32> to vector<8x128xf32>
    %134 = arith.addf %132, %133 : vector<8x128xf32>
    %135 = vector.extract_strided_slice %131 {offsets = [0, 0], sizes = [8, 32], strides = [1, 1]} : vector<8x128xf32> to vector<8x32xf32>
    %136 = vector.extract_strided_slice %134 {offsets = [0, 0], sizes = [8, 32], strides = [1, 1]} : vector<8x128xf32> to vector<8x32xf32>
    %137 = arith.addf %135, %136 : vector<8x32xf32>
    %138 = arith.negf %137 : vector<8x32xf32>
    %139 = math.exp %138 : vector<8x32xf32>
    %cst_33 = arith.constant 1.000000e+00 : f32
    %140 = vector.broadcast %cst_33 : f32 to vector<8x32xf32>
    %141 = arith.addf %140, %139 : vector<8x32xf32>
    %142 = arith.divf %140, %141 : vector<8x32xf32>
    %143 = vector.extract_strided_slice %131 {offsets = [0, 32], sizes = [8, 32], strides = [1, 1]} : vector<8x128xf32> to vector<8x32xf32>
    %144 = vector.extract_strided_slice %134 {offsets = [0, 32], sizes = [8, 32], strides = [1, 1]} : vector<8x128xf32> to vector<8x32xf32>
    %145 = arith.addf %143, %144 : vector<8x32xf32>
    %146 = arith.negf %145 : vector<8x32xf32>
    %147 = math.exp %146 : vector<8x32xf32>
    %cst_34 = arith.constant 1.000000e+00 : f32
    %148 = vector.broadcast %cst_34 : f32 to vector<8x32xf32>
    %149 = arith.addf %148, %147 : vector<8x32xf32>
    %150 = arith.divf %148, %149 : vector<8x32xf32>
    %151 = vector.extract_strided_slice %131 {offsets = [0, 64], sizes = [8, 32], strides = [1, 1]} : vector<8x128xf32> to vector<8x32xf32>
    %152 = vector.extract_strided_slice %134 {offsets = [0, 64], sizes = [8, 32], strides = [1, 1]} : vector<8x128xf32> to vector<8x32xf32>
    %153 = arith.mulf %142, %152 : vector<8x32xf32>
    %154 = arith.addf %151, %153 : vector<8x32xf32>
    %155 = math.tanh %154 : vector<8x32xf32>
    %cst_35 = arith.constant 1.000000e+00 : f32
    %156 = vector.broadcast %cst_35 : f32 to vector<8x32xf32>
    %157 = arith.subf %156, %150 : vector<8x32xf32>
    %158 = arith.mulf %157, %155 : vector<8x32xf32>
    %159 = arith.mulf %150, %129 : vector<8x32xf32>
    %160 = arith.addf %158, %159 : vector<8x32xf32>
    %c5 = arith.constant 5 : index
    %c0_36 = arith.constant 0 : index
    %c0_37 = arith.constant 0 : index
    %161 = vector.load %arg2[%c5, %c0_36, %c0_37] : memref<8x8x128xf32, #tpu.memory_space<vmem>>, vector<1x8x128xf32>
    %162 = vector.shape_cast %161 : vector<1x8x128xf32> to vector<8x128xf32>
    %cst_38 = arith.constant dense<0.000000e+00> : vector<8x128xf32>
    %163 = tpu.matmul %160, %3, %cst_38 {dimension_numbers = #tpu.dot_dimension_numbers<[1], [0], [0], [1], [0, 0, 1, 1], [], []>} : vector<8x32xf32>, vector<32x128xf32>, vector<8x128xf32> -> vector<8x128xf32>
    %164 = vector.broadcast %4 : vector<1x128xf32> to vector<8x128xf32>
    %165 = arith.addf %163, %164 : vector<8x128xf32>
    %166 = vector.extract_strided_slice %162 {offsets = [0, 0], sizes = [8, 32], strides = [1, 1]} : vector<8x128xf32> to vector<8x32xf32>
    %167 = vector.extract_strided_slice %165 {offsets = [0, 0], sizes = [8, 32], strides = [1, 1]} : vector<8x128xf32> to vector<8x32xf32>
    %168 = arith.addf %166, %167 : vector<8x32xf32>
    %169 = arith.negf %168 : vector<8x32xf32>
    %170 = math.exp %169 : vector<8x32xf32>
    %cst_39 = arith.constant 1.000000e+00 : f32
    %171 = vector.broadcast %cst_39 : f32 to vector<8x32xf32>
    %172 = arith.addf %171, %170 : vector<8x32xf32>
    %173 = arith.divf %171, %172 : vector<8x32xf32>
    %174 = vector.extract_strided_slice %162 {offsets = [0, 32], sizes = [8, 32], strides = [1, 1]} : vector<8x128xf32> to vector<8x32xf32>
    %175 = vector.extract_strided_slice %165 {offsets = [0, 32], sizes = [8, 32], strides = [1, 1]} : vector<8x128xf32> to vector<8x32xf32>
    %176 = arith.addf %174, %175 : vector<8x32xf32>
    %177 = arith.negf %176 : vector<8x32xf32>
    %178 = math.exp %177 : vector<8x32xf32>
    %cst_40 = arith.constant 1.000000e+00 : f32
    %179 = vector.broadcast %cst_40 : f32 to vector<8x32xf32>
    %180 = arith.addf %179, %178 : vector<8x32xf32>
    %181 = arith.divf %179, %180 : vector<8x32xf32>
    %182 = vector.extract_strided_slice %162 {offsets = [0, 64], sizes = [8, 32], strides = [1, 1]} : vector<8x128xf32> to vector<8x32xf32>
    %183 = vector.extract_strided_slice %165 {offsets = [0, 64], sizes = [8, 32], strides = [1, 1]} : vector<8x128xf32> to vector<8x32xf32>
    %184 = arith.mulf %173, %183 : vector<8x32xf32>
    %185 = arith.addf %182, %184 : vector<8x32xf32>
    %186 = math.tanh %185 : vector<8x32xf32>
    %cst_41 = arith.constant 1.000000e+00 : f32
    %187 = vector.broadcast %cst_41 : f32 to vector<8x32xf32>
    %188 = arith.subf %187, %181 : vector<8x32xf32>
    %189 = arith.mulf %188, %186 : vector<8x32xf32>
    %190 = arith.mulf %181, %160 : vector<8x32xf32>
    %191 = arith.addf %189, %190 : vector<8x32xf32>
    %c6 = arith.constant 6 : index
    %c0_42 = arith.constant 0 : index
    %c0_43 = arith.constant 0 : index
    %192 = vector.load %arg2[%c6, %c0_42, %c0_43] : memref<8x8x128xf32, #tpu.memory_space<vmem>>, vector<1x8x128xf32>
    %193 = vector.shape_cast %192 : vector<1x8x128xf32> to vector<8x128xf32>
    %cst_44 = arith.constant dense<0.000000e+00> : vector<8x128xf32>
    %194 = tpu.matmul %191, %3, %cst_44 {dimension_numbers = #tpu.dot_dimension_numbers<[1], [0], [0], [1], [0, 0, 1, 1], [], []>} : vector<8x32xf32>, vector<32x128xf32>, vector<8x128xf32> -> vector<8x128xf32>
    %195 = vector.broadcast %4 : vector<1x128xf32> to vector<8x128xf32>
    %196 = arith.addf %194, %195 : vector<8x128xf32>
    %197 = vector.extract_strided_slice %193 {offsets = [0, 0], sizes = [8, 32], strides = [1, 1]} : vector<8x128xf32> to vector<8x32xf32>
    %198 = vector.extract_strided_slice %196 {offsets = [0, 0], sizes = [8, 32], strides = [1, 1]} : vector<8x128xf32> to vector<8x32xf32>
    %199 = arith.addf %197, %198 : vector<8x32xf32>
    %200 = arith.negf %199 : vector<8x32xf32>
    %201 = math.exp %200 : vector<8x32xf32>
    %cst_45 = arith.constant 1.000000e+00 : f32
    %202 = vector.broadcast %cst_45 : f32 to vector<8x32xf32>
    %203 = arith.addf %202, %201 : vector<8x32xf32>
    %204 = arith.divf %202, %203 : vector<8x32xf32>
    %205 = vector.extract_strided_slice %193 {offsets = [0, 32], sizes = [8, 32], strides = [1, 1]} : vector<8x128xf32> to vector<8x32xf32>
    %206 = vector.extract_strided_slice %196 {offsets = [0, 32], sizes = [8, 32], strides = [1, 1]} : vector<8x128xf32> to vector<8x32xf32>
    %207 = arith.addf %205, %206 : vector<8x32xf32>
    %208 = arith.negf %207 : vector<8x32xf32>
    %209 = math.exp %208 : vector<8x32xf32>
    %cst_46 = arith.constant 1.000000e+00 : f32
    %210 = vector.broadcast %cst_46 : f32 to vector<8x32xf32>
    %211 = arith.addf %210, %209 : vector<8x32xf32>
    %212 = arith.divf %210, %211 : vector<8x32xf32>
    %213 = vector.extract_strided_slice %193 {offsets = [0, 64], sizes = [8, 32], strides = [1, 1]} : vector<8x128xf32> to vector<8x32xf32>
    %214 = vector.extract_strided_slice %196 {offsets = [0, 64], sizes = [8, 32], strides = [1, 1]} : vector<8x128xf32> to vector<8x32xf32>
    %215 = arith.mulf %204, %214 : vector<8x32xf32>
    %216 = arith.addf %213, %215 : vector<8x32xf32>
    %217 = math.tanh %216 : vector<8x32xf32>
    %cst_47 = arith.constant 1.000000e+00 : f32
    %218 = vector.broadcast %cst_47 : f32 to vector<8x32xf32>
    %219 = arith.subf %218, %212 : vector<8x32xf32>
    %220 = arith.mulf %219, %217 : vector<8x32xf32>
    %221 = arith.mulf %212, %191 : vector<8x32xf32>
    %222 = arith.addf %220, %221 : vector<8x32xf32>
    %c7 = arith.constant 7 : index
    %c0_48 = arith.constant 0 : index
    %c0_49 = arith.constant 0 : index
    %223 = vector.load %arg2[%c7, %c0_48, %c0_49] : memref<8x8x128xf32, #tpu.memory_space<vmem>>, vector<1x8x128xf32>
    %224 = vector.shape_cast %223 : vector<1x8x128xf32> to vector<8x128xf32>
    %cst_50 = arith.constant dense<0.000000e+00> : vector<8x128xf32>
    %225 = tpu.matmul %222, %3, %cst_50 {dimension_numbers = #tpu.dot_dimension_numbers<[1], [0], [0], [1], [0, 0, 1, 1], [], []>} : vector<8x32xf32>, vector<32x128xf32>, vector<8x128xf32> -> vector<8x128xf32>
    %226 = vector.broadcast %4 : vector<1x128xf32> to vector<8x128xf32>
    %227 = arith.addf %225, %226 : vector<8x128xf32>
    %228 = vector.extract_strided_slice %224 {offsets = [0, 0], sizes = [8, 32], strides = [1, 1]} : vector<8x128xf32> to vector<8x32xf32>
    %229 = vector.extract_strided_slice %227 {offsets = [0, 0], sizes = [8, 32], strides = [1, 1]} : vector<8x128xf32> to vector<8x32xf32>
    %230 = arith.addf %228, %229 : vector<8x32xf32>
    %231 = arith.negf %230 : vector<8x32xf32>
    %232 = math.exp %231 : vector<8x32xf32>
    %cst_51 = arith.constant 1.000000e+00 : f32
    %233 = vector.broadcast %cst_51 : f32 to vector<8x32xf32>
    %234 = arith.addf %233, %232 : vector<8x32xf32>
    %235 = arith.divf %233, %234 : vector<8x32xf32>
    %236 = vector.extract_strided_slice %224 {offsets = [0, 32], sizes = [8, 32], strides = [1, 1]} : vector<8x128xf32> to vector<8x32xf32>
    %237 = vector.extract_strided_slice %227 {offsets = [0, 32], sizes = [8, 32], strides = [1, 1]} : vector<8x128xf32> to vector<8x32xf32>
    %238 = arith.addf %236, %237 : vector<8x32xf32>
    %239 = arith.negf %238 : vector<8x32xf32>
    %240 = math.exp %239 : vector<8x32xf32>
    %cst_52 = arith.constant 1.000000e+00 : f32
    %241 = vector.broadcast %cst_52 : f32 to vector<8x32xf32>
    %242 = arith.addf %241, %240 : vector<8x32xf32>
    %243 = arith.divf %241, %242 : vector<8x32xf32>
    %244 = vector.extract_strided_slice %224 {offsets = [0, 64], sizes = [8, 32], strides = [1, 1]} : vector<8x128xf32> to vector<8x32xf32>
    %245 = vector.extract_strided_slice %227 {offsets = [0, 64], sizes = [8, 32], strides = [1, 1]} : vector<8x128xf32> to vector<8x32xf32>
    %246 = arith.mulf %235, %245 : vector<8x32xf32>
    %247 = arith.addf %244, %246 : vector<8x32xf32>
    %248 = math.tanh %247 : vector<8x32xf32>
    %cst_53 = arith.constant 1.000000e+00 : f32
    %249 = vector.broadcast %cst_53 : f32 to vector<8x32xf32>
    %250 = arith.subf %249, %243 : vector<8x32xf32>
    %251 = arith.mulf %250, %248 : vector<8x32xf32>
    %252 = arith.mulf %243, %222 : vector<8x32xf32>
    %253 = arith.addf %251, %252 : vector<8x32xf32>
    %c0_54 = arith.constant 0 : index
    %c0_55 = arith.constant 0 : index
    %254 = vector.load %arg6[%c0_54, %c0_55] : memref<8x32xf32, #tpu.memory_space<vmem>>, vector<8x32xf32>
    tpu.vector_store %arg6[%c0_54, %c0_55], %253 {strides = array<i32>} : memref<8x32xf32, #tpu.memory_space<vmem>>, vector<8x32xf32>,
    %c0_i32_56 = arith.constant 0 : i32
    %255 = arith.cmpi eq, %arg1, %c0_i32_56 : i32
    %256 = arith.extui %255 : i1 to i32
    %c0_i32_57 = arith.constant 0 : i32
    %257 = arith.cmpi ne, %256, %c0_i32_57 : i32
    scf.if %257 {
      %c0_58 = arith.constant 0 : index
      %c0_59 = arith.constant 0 : index
      %258 = vector.load %arg5[%c0_58, %c0_59] : memref<8x32xf32, #tpu.memory_space<vmem>>, vector<8x32xf32>
      tpu.vector_store %arg5[%c0_58, %c0_59], %253 {strides = array<i32>} : memref<8x32xf32, #tpu.memory_space<vmem>>, vector<8x32xf32>,
    } else {
    }
    return
  }
  func.func @transform_0(%arg0: i32, %arg1: i32) -> (i32, i32, i32) {
    %c0_i32 = arith.constant 0 : i32
    %c0_i32_0 = arith.constant 0 : i32
    return %arg1, %arg0, %c0_i32 : i32, i32, i32
  }
  func.func @transform_1(%arg0: i32, %arg1: i32) -> (i32, i32) {
    %c0_i32 = arith.constant 0 : i32
    %c0_i32_0 = arith.constant 0 : i32
    %c0_i32_1 = arith.constant 0 : i32
    return %c0_i32, %c0_i32_0 : i32, i32
  }
  func.func @transform_2(%arg0: i32, %arg1: i32) -> (i32, i32) {
    %c0_i32 = arith.constant 0 : i32
    %c0_i32_0 = arith.constant 0 : i32
    %c0_i32_1 = arith.constant 0 : i32
    return %c0_i32, %c0_i32_0 : i32, i32
  }
  func.func @transform_3(%arg0: i32, %arg1: i32) -> (i32, i32) {
    %c0_i32 = arith.constant 0 : i32
    %c0_i32_0 = arith.constant 0 : i32
    return %arg0, %c0_i32 : i32, i32
  }
}

</mosaic_0001>

<llo_original>
// kernel: tpu_custom_call.1
$region0: #{tpu_custom_call.1}
  #allocation0 [shape = 'u32[]', space=smem, size = 0x4, offset = 0x4, fixed_abs, tag = 'smem constant byte address 0x4 - core index']
  #allocation1 [shape = 'u32[144,128]{1,0:T(1,128)}', space=vmem, size = 0x12000, scoped, tag = 'internal scratch']
  #allocation2 [shape = 'f32[8,32]{1,0:T(8,128)}', space=vmem, size = 0x1000, scoped, tag = 'scratch operand']
  %s0 = inlined_call_operand.hbm [shape: f32[8,8,128], index: 0, kind: input, shape index: {}]
  %s1 = inlined_call_operand.hbm [shape: f32[32,128], index: 1, kind: input, shape index: {}]
  %s2 = inlined_call_operand.vmem [shape: f32[1,128], index: 2, kind: input, shape index: {}]
  %s3 = inlined_call_operand.hbm [shape: f32[8,32], index: 3, kind: output, shape index: {}]
  %s4 = sld [smem:[#allocation0]]
  $region38: #{tpu_custom_call.1} parent=0
    _
  %s6 = ssub.s32 1, %s4
  %s7 = scalar_select 0, %s6, %s4
  $region1: #{tpu_custom_call.1} parent=0
    #allocation3 [shape = 'u8[32768]{0}', space=vmem, size = 0x8000, scoped, tag = 'input window, operand 0, single buffered']
    #allocation4 [shape = 's32[1]{0}', space=sflag, size = 0x4, scoped, tag = 'scoped memory for tpu_custom_call.1']
    #allocation5 [shape = 's32[1]{0}', space=sflag, size = 0x4, scoped, tag = 'scoped memory for tpu_custom_call.1']
    #allocation6 [shape = 'u8[16384]{0}', space=vmem, size = 0x4000, scoped, tag = 'input window, operand 1, single buffered']
    #allocation7 [shape = 's32[1]{0}', space=sflag, size = 0x4, scoped, tag = 'scoped memory for tpu_custom_call.1']
    #allocation8 [shape = 'u8[4096]{0}', space=vmem, size = 0x1000, scoped, tag = 'output window, operand 0, single buffered']
    %8 = vsyncpa [#allocation4], 0
    %9 = vsyncpa [#allocation7], 0
    %10 = vsyncpa [#allocation5], 0
    // Predicated region
    $region2: #{tpu_custom_call.1} parent=1 // pred_check
      _
    $region3: #{tpu_custom_call.1} parent=1 // pred_check_branch
      %12 = sbr.rel (0) target = $region5
    $region4: #{tpu_custom_call.1} parent=1 // pred_region
      %s14 = ssub.s32 1024, 1024
      %15 = vsyncadd [#allocation4], %s14
      %s16 = sshll.u32 [#allocation3], 4
      %s17 = int_to_ptr.vmem [resolvable:$true] %s16
      %22 = dma.hbm_to_vmem [thread:$0]  %s0, 1024, %s17, [#allocation4], 128, 128, 8
    $region5: #{tpu_custom_call.1} parent=1 // pred_fallthru
      _
    // Predicated region
    $region6: #{tpu_custom_call.1} parent=1 // pred_check
      _
    $region7: #{tpu_custom_call.1} parent=1 // pred_check_branch
      %24 = sbr.rel (0) target = $region9
    $region8: #{tpu_custom_call.1} parent=1 // pred_region
      %s26 = ssub.s32 512, 512
      %27 = vsyncadd [#allocation7], %s26
      %s28 = sshll.u32 [#allocation6], 4
      %s29 = int_to_ptr.vmem [resolvable:$true] %s28
      %34 = dma.hbm_to_vmem [thread:$0]  %s1, 512, %s29, [#allocation7], 128, 128, 8
    $region9: #{tpu_custom_call.1} parent=1 // pred_fallthru
      _
    // Predicated region
    $region10: #{tpu_custom_call.1} parent=1 // pred_check
      _
    $region11: #{tpu_custom_call.1} parent=1 // pred_check_branch
      %36 = sbr.rel (0) target = $region13
    $region12: #{tpu_custom_call.1} parent=1 // pred_region
      _
    $region13: #{tpu_custom_call.1} parent=1 // pred_fallthru
      _
    // Predicated region
    $region14: #{tpu_custom_call.1} parent=1 // pred_check
      _
    $region15: #{tpu_custom_call.1} parent=1 // pred_check_branch
      %38 = sbr.rel (0) target = $region17
    $region16: #{tpu_custom_call.1} parent=1 // pred_region
      %39 = dma.done [#allocation4], 1024
    $region17: #{tpu_custom_call.1} parent=1 // pred_fallthru
      _
    // Predicated region
    $region18: #{tpu_custom_call.1} parent=1 // pred_check
      _
    $region19: #{tpu_custom_call.1} parent=1 // pred_check_branch
      %41 = sbr.rel (0) target = $region21
    $region20: #{tpu_custom_call.1} parent=1 // pred_region
      %42 = dma.done [#allocation7], 512
    $region21: #{tpu_custom_call.1} parent=1 // pred_fallthru
      _
    %p43 = scmp.eq.s32.totalorder 0, 0
    // Predicated region
    $region22: #{tpu_custom_call.1} parent=1 // pred_check
      %p44 = pneg %p43
    $region23: #{tpu_custom_call.1} parent=1 // pred_check_branch
      %46 = sbr.rel (%p44) target = $region25
    $region24: #{tpu_custom_call.1} parent=1 // pred_region
      %vm47 = vcmask 261120
      %48 = vst.msk [vmem:[#allocation2] sm:$0xff] %vm47, 0.0
    $region25: #{tpu_custom_call.1} parent=1 // pred_fallthru
      _
    %v49 = vld [vmem:[#allocation6] sm:$0xff]
    %v50 = vld [vmem:[#allocation6 + $0x8] sm:$0xff]
    %v51 = vld [vmem:[#allocation6 + $0x10] sm:$0xff]
    %v52 = vld [vmem:[#allocation6 + $0x18] sm:$0xff]
    %v53 = vld [vmem:[%s2] sm:$0x1]
    %v54 = vld [vmem:[#allocation2] sm:$0xff]
    %v55 = vld [vmem:[#allocation3] sm:$0xff]
    %v57 = vlaneseq
    %v58 = vshrl.u32 %v57, 7
    %v59 = vsub.s32 0, %v58
    %v60 = vrot.slane %v53, %v59
    %vm62 = vcmask 261120
    %v64 = vsel %vm62, %v54, 0
    %66 = vmatprep.subr.mxu0 0.0
    %67 = vmatpush1.msra.mxu0 0.0
    %68 = vmatprep.subr.mxu0 0.0
    %69 = vmatpush1.msra.mxu0 0.0
    %70 = vmatprep.subr.mxu0 0.0
    %71 = vmatpush1.msra.mxu0 0.0
    %72 = vmatprep.subr.mxu0 0.0
    %73 = vmatpush1.msra.mxu0 0.0
    %74 = vmatprep.subr.mxu0 0.0
    %75 = vmatpush1.msra.mxu0 0.0
    %76 = vmatprep.subr.mxu0 0.0
    %77 = vmatpush1.msra.mxu0 0.0
    %78 = vmatprep.subr.mxu0 0.0
    %79 = vmatpush1.msra.mxu0 0.0
    %80 = vmatprep.subr.mxu0 0.0
    %81 = vmatpush1.msra.mxu0 0.0
    %82 = vmatprep.subr.mxu0 0.0
    %83 = vmatpush1.msra.mxu0 0.0
    %84 = vmatprep.subr.mxu0 0.0
    %85 = vmatpush1.msra.mxu0 0.0
    %86 = vmatprep.subr.mxu0 0.0
    %87 = vmatpush1.msra.mxu0 0.0
    %88 = vmatprep.subr.mxu0 0.0
    %89 = vmatpush1.msra.mxu0 0.0
    %90 = vmatprep.subr.mxu0 0.0
    %91 = vmatpush1.msra.mxu0 %v52
    %92 = vmatprep.subr.mxu0 0.0
    %93 = vmatpush1.msra.mxu0 %v51
    %94 = vmatprep.subr.mxu0 0.0
    %95 = vmatpush1.msra.mxu0 %v50
    %96 = vmatprep.subr.mxu0 0.0
    %97 = vmatpush1.msra.mxu0 %v49
    %98 = vmatprep.subr.mxu0 0.0
    %99 = vmatpush2.msra.mxu0 0.0
    %100 = vmatprep.subr.mxu0 0.0
    %101 = vmatpush2.msra.mxu0 0.0
    %102 = vmatprep.subr.mxu0 0.0
    %103 = vmatpush2.msra.mxu0 0.0
    %104 = vmatprep.subr.mxu0 0.0
    %105 = vmatpush2.msra.mxu0 0.0
    %106 = vmatprep.subr.mxu0 0.0
    %107 = vmatpush2.msra.mxu0 0.0
    %108 = vmatprep.subr.mxu0 0.0
    %109 = vmatpush2.msra.mxu0 0.0
    %110 = vmatprep.subr.mxu0 0.0
    %111 = vmatpush2.msra.mxu0 0.0
    %112 = vmatprep.subr.mxu0 0.0
    %113 = vmatpush2.msra.mxu0 0.0
    %114 = vmatprep.subr.mxu0 0.0
    %115 = vmatpush2.msra.mxu0 0.0
    %116 = vmatprep.subr.mxu0 0.0
    %117 = vmatpush2.msra.mxu0 0.0
    %118 = vmatprep.subr.mxu0 0.0
    %119 = vmatpush2.msra.mxu0 0.0
    %120 = vmatprep.subr.mxu0 0.0
    %121 = vmatpush2.msra.mxu0 0.0
    %122 = vmatprep.subr.mxu0 0.0
    %123 = vmatpush2.msra.mxu0 0.0
    %124 = vmatprep.subr.mxu0 0.0
    %125 = vmatpush2.msra.mxu0 0.0
    %126 = vmatprep.subr.mxu0 0.0
    %127 = vmatpush2.msra.mxu0 0.0
    %128 = vmatprep.subr.mxu0 0.0
    %129 = vmatpush2.msra.mxu0 0.0
    %130 = vmatprep.mubr.f32.mxu0 0.0
    %131 = vmatmul.mubr.f32.gmra.mxu0 %v64
    %v132 = vpop.f32.mrf.mxu0
    %v133 = vadd.f32 %v60, %v132
    %v134 = vpop.f32.mrf.mxu0
    %135 = vdwg.mxu0
    %v136 = vadd.f32 %v55, %v133
    %v137 = vxor.u32 %v136, 2147483648
    %v138 = vmul.f32 %v137, 1.442695
    %v139 = vpow.pop %v138
    %v140 = vadd.f32 %v139, 1.0
    %v141 = vrcp.pop %v140
    %v142 = vmul.f32 1.0, %v141
    %144 = vrot.lane.b32.xlu0 %v133, 64
    %v145 = vpop.permute.xlu0 %144
    %v147 = vmul.f32 %v142, %v145
    %149 = vrot.lane.b32.xlu0 %v147, 64
    %v150 = vpop.permute.xlu0 %149
    %v152 = vadd.f32 %v55, %v150
    %v153 = vtanh.pop %v152
    %v154 = vsub.f32 1.0, %v142
    %156 = vrot.lane.b32.xlu0 %v153, 96
    %v157 = vpop.permute.xlu0 %156
    %v159 = vmul.f32 %v154, %v157
    %160 = vrot.lane.b32.xlu0 %v54, 32
    %v161 = vpop.permute.xlu0 %160
    %v163 = vmul.f32 %v142, %v161
    %v164 = vadd.f32 %v159, %v163
    %s165 = scalar_lea.vmem [#allocation3], 8
    %v166 = vld [vmem:[%s165] sm:$0xff]
    %168 = vrot.lane.b32.xlu0 %v164, 96
    %v169 = vpop.permute.xlu0 %168
    %v170 = vsel %vm62, %v169, 0
    %172 = vmatprep.subr.mxu0 0.0
    %173 = vmatpush1.msra.mxu0 0.0
    %174 = vmatprep.subr.mxu0 0.0
    %175 = vmatpush1.msra.mxu0 0.0
    %176 = vmatprep.subr.mxu0 0.0
    %177 = vmatpush1.msra.mxu0 0.0
    %178 = vmatprep.subr.mxu0 0.0
    %179 = vmatpush1.msra.mxu0 0.0
    %180 = vmatprep.subr.mxu0 0.0
    %181 = vmatpush1.msra.mxu0 0.0
    %182 = vmatprep.subr.mxu0 0.0
    %183 = vmatpush1.msra.mxu0 0.0
    %184 = vmatprep.subr.mxu0 0.0
    %185 = vmatpush1.msra.mxu0 0.0
    %186 = vmatprep.subr.mxu0 0.0
    %187 = vmatpush1.msra.mxu0 0.0
    %188 = vmatprep.subr.mxu0 0.0
    %189 = vmatpush1.msra.mxu0 0.0
    %190 = vmatprep.subr.mxu0 0.0
    %191 = vmatpush1.msra.mxu0 0.0
    %192 = vmatprep.subr.mxu0 0.0
    %193 = vmatpush1.msra.mxu0 0.0
    %194 = vmatprep.subr.mxu0 0.0
    %195 = vmatpush1.msra.mxu0 0.0
    %196 = vmatprep.subr.mxu0 0.0
    %197 = vmatpush1.msra.mxu0 %v52
    %198 = vmatprep.subr.mxu0 0.0
    %199 = vmatpush1.msra.mxu0 %v51
    %200 = vmatprep.subr.mxu0 0.0
    %201 = vmatpush1.msra.mxu0 %v50
    %202 = vmatprep.subr.mxu0 0.0
    %203 = vmatpush1.msra.mxu0 %v49
    %204 = vmatprep.subr.mxu0 0.0
    %205 = vmatpush2.msra.mxu0 0.0
    %206 = vmatprep.subr.mxu0 0.0
    %207 = vmatpush2.msra.mxu0 0.0
    %208 = vmatprep.subr.mxu0 0.0
    %209 = vmatpush2.msra.mxu0 0.0
    %210 = vmatprep.subr.mxu0 0.0
    %211 = vmatpush2.msra.mxu0 0.0
    %212 = vmatprep.subr.mxu0 0.0
    %213 = vmatpush2.msra.mxu0 0.0
    %214 = vmatprep.subr.mxu0 0.0
    %215 = vmatpush2.msra.mxu0 0.0
    %216 = vmatprep.subr.mxu0 0.0
    %217 = vmatpush2.msra.mxu0 0.0
    %218 = vmatprep.subr.mxu0 0.0
    %219 = vmatpush2.msra.mxu0 0.0
    %220 = vmatprep.subr.mxu0 0.0
    %221 = vmatpush2.msra.mxu0 0.0
    %222 = vmatprep.subr.mxu0 0.0
    %223 = vmatpush2.msra.mxu0 0.0
    %224 = vmatprep.subr.mxu0 0.0
    %225 = vmatpush2.msra.mxu0 0.0
    %226 = vmatprep.subr.mxu0 0.0
    %227 = vmatpush2.msra.mxu0 0.0
    %228 = vmatprep.subr.mxu0 0.0
    %229 = vmatpush2.msra.mxu0 0.0
    %230 = vmatprep.subr.mxu0 0.0
    %231 = vmatpush2.msra.mxu0 0.0
    %232 = vmatprep.subr.mxu0 0.0
    %233 = vmatpush2.msra.mxu0 0.0
    %234 = vmatprep.subr.mxu0 0.0
    %235 = vmatpush2.msra.mxu0 0.0
    %236 = vmatprep.mubr.f32.mxu0 0.0
    %237 = vmatmul.mubr.f32.gmra.mxu0 %v170
    %v238 = vpop.f32.mrf.mxu0
    %v239 = vadd.f32 %v60, %v238
    %v240 = vpop.f32.mrf.mxu0
    %241 = vdwg.mxu0
    %v242 = vadd.f32 %v166, %v239
    %v243 = vxor.u32 %v242, 2147483648
    %v244 = vmul.f32 %v243, 1.442695
    %v245 = vpow.pop %v244
    %v246 = vadd.f32 %v245, 1.0
    %v247 = vrcp.pop %v246
    %v248 = vmul.f32 1.0, %v247
    %250 = vrot.lane.b32.xlu0 %v239, 64
    %v251 = vpop.permute.xlu0 %250
    %v253 = vmul.f32 %v248, %v251
    %255 = vrot.lane.b32.xlu0 %v253, 64
    %v256 = vpop.permute.xlu0 %255
    %v258 = vadd.f32 %v166, %v256
    %v259 = vtanh.pop %v258
    %v260 = vsub.f32 1.0, %v248
    %262 = vrot.lane.b32.xlu0 %v259, 96
    %v263 = vpop.permute.xlu0 %262
    %v265 = vmul.f32 %v260, %v263
    %v266 = vmul.f32 %v248, %v164
    %v267 = vadd.f32 %v265, %v266
    %s268 = scalar_lea.vmem [#allocation3], 16
    %v269 = vld [vmem:[%s268] sm:$0xff]
    %271 = vrot.lane.b32.xlu0 %v267, 96
    %v272 = vpop.permute.xlu0 %271
    %v273 = vsel %vm62, %v272, 0
    %275 = vmatprep.subr.mxu0 0.0
    %276 = vmatpush1.msra.mxu0 0.0
    %277 = vmatprep.subr.mxu0 0.0
    %278 = vmatpush1.msra.mxu0 0.0
    %279 = vmatprep.subr.mxu0 0.0
    %280 = vmatpush1.msra.mxu0 0.0
    %281 = vmatprep.subr.mxu0 0.0
    %282 = vmatpush1.msra.mxu0 0.0
    %283 = vmatprep.subr.mxu0 0.0
    %284 = vmatpush1.msra.mxu0 0.0
    %285 = vmatprep.subr.mxu0 0.0
    %286 = vmatpush1.msra.mxu0 0.0
    %287 = vmatprep.subr.mxu0 0.0
    %288 = vmatpush1.msra.mxu0 0.0
    %289 = vmatprep.subr.mxu0 0.0
    %290 = vmatpush1.msra.mxu0 0.0
    %291 = vmatprep.subr.mxu0 0.0
    %292 = vmatpush1.msra.mxu0 0.0
    %293 = vmatprep.subr.mxu0 0.0
    %294 = vmatpush1.msra.mxu0 0.0
    %295 = vmatprep.subr.mxu0 0.0
    %296 = vmatpush1.msra.mxu0 0.0
    %297 = vmatprep.subr.mxu0 0.0
    %298 = vmatpush1.msra.mxu0 0.0
    %299 = vmatprep.subr.mxu0 0.0
    %300 = vmatpush1.msra.mxu0 %v52
    %301 = vmatprep.subr.mxu0 0.0
    %302 = vmatpush1.msra.mxu0 %v51
    %303 = vmatprep.subr.mxu0 0.0
    %304 = vmatpush1.msra.mxu0 %v50
    %305 = vmatprep.subr.mxu0 0.0
    %306 = vmatpush1.msra.mxu0 %v49
    %307 = vmatprep.subr.mxu0 0.0
    %308 = vmatpush2.msra.mxu0 0.0
    %309 = vmatprep.subr.mxu0 0.0
    %310 = vmatpush2.msra.mxu0 0.0
    %311 = vmatprep.subr.mxu0 0.0
    %312 = vmatpush2.msra.mxu0 0.0
    %313 = vmatprep.subr.mxu0 0.0
    %314 = vmatpush2.msra.mxu0 0.0
    %315 = vmatprep.subr.mxu0 0.0
    %316 = vmatpush2.msra.mxu0 0.0
    %317 = vmatprep.subr.mxu0 0.0
    %318 = vmatpush2.msra.mxu0 0.0
    %319 = vmatprep.subr.mxu0 0.0
    %320 = vmatpush2.msra.mxu0 0.0
    %321 = vmatprep.subr.mxu0 0.0
    %322 = vmatpush2.msra.mxu0 0.0
    %323 = vmatprep.subr.mxu0 0.0
    %324 = vmatpush2.msra.mxu0 0.0
    %325 = vmatprep.subr.mxu0 0.0
    %326 = vmatpush2.msra.mxu0 0.0
    %327 = vmatprep.subr.mxu0 0.0
    %328 = vmatpush2.msra.mxu0 0.0
    %329 = vmatprep.subr.mxu0 0.0
    %330 = vmatpush2.msra.mxu0 0.0
    %331 = vmatprep.subr.mxu0 0.0
    %332 = vmatpush2.msra.mxu0 0.0
    %333 = vmatprep.subr.mxu0 0.0
    %334 = vmatpush2.msra.mxu0 0.0
    %335 = vmatprep.subr.mxu0 0.0
    %336 = vmatpush2.msra.mxu0 0.0
    %337 = vmatprep.subr.mxu0 0.0
    %338 = vmatpush2.msra.mxu0 0.0
    %339 = vmatprep.mubr.f32.mxu0 0.0
    %340 = vmatmul.mubr.f32.gmra.mxu0 %v273
    %v341 = vpop.f32.mrf.mxu0
    %v342 = vadd.f32 %v60, %v341
    %v343 = vpop.f32.mrf.mxu0
    %344 = vdwg.mxu0
    %v345 = vadd.f32 %v269, %v342
    %v346 = vxor.u32 %v345, 2147483648
    %v347 = vmul.f32 %v346, 1.442695
    %v348 = vpow.pop %v347
    %v349 = vadd.f32 %v348, 1.0
    %v350 = vrcp.pop %v349
    %v351 = vmul.f32 1.0, %v350
    %353 = vrot.lane.b32.xlu0 %v342, 64
    %v354 = vpop.permute.xlu0 %353
    %v356 = vmul.f32 %v351, %v354
    %358 = vrot.lane.b32.xlu0 %v356, 64
    %v359 = vpop.permute.xlu0 %358
    %v361 = vadd.f32 %v269, %v359
    %v362 = vtanh.pop %v361
    %v363 = vsub.f32 1.0, %v351
    %365 = vrot.lane.b32.xlu0 %v362, 96
    %v366 = vpop.permute.xlu0 %365
    %v368 = vmul.f32 %v363, %v366
    %v369 = vmul.f32 %v351, %v267
    %v370 = vadd.f32 %v368, %v369
    %s371 = scalar_lea.vmem [#allocation3], 24
    %v372 = vld [vmem:[%s371] sm:$0xff]
    %374 = vrot.lane.b32.xlu0 %v370, 96
    %v375 = vpop.permute.xlu0 %374
    %v376 = vsel %vm62, %v375, 0
    %378 = vmatprep.subr.mxu0 0.0
    %379 = vmatpush1.msra.mxu0 0.0
    %380 = vmatprep.subr.mxu0 0.0
    %381 = vmatpush1.msra.mxu0 0.0
    %382 = vmatprep.subr.mxu0 0.0
    %383 = vmatpush1.msra.mxu0 0.0
    %384 = vmatprep.subr.mxu0 0.0
    %385 = vmatpush1.msra.mxu0 0.0
    %386 = vmatprep.subr.mxu0 0.0
    %387 = vmatpush1.msra.mxu0 0.0
    %388 = vmatprep.subr.mxu0 0.0
    %389 = vmatpush1.msra.mxu0 0.0
    %390 = vmatprep.subr.mxu0 0.0
    %391 = vmatpush1.msra.mxu0 0.0
    %392 = vmatprep.subr.mxu0 0.0
    %393 = vmatpush1.msra.mxu0 0.0
    %394 = vmatprep.subr.mxu0 0.0
    %395 = vmatpush1.msra.mxu0 0.0
    %396 = vmatprep.subr.mxu0 0.0
    %397 = vmatpush1.msra.mxu0 0.0
    %398 = vmatprep.subr.mxu0 0.0
    %399 = vmatpush1.msra.mxu0 0.0
    %400 = vmatprep.subr.mxu0 0.0
    %401 = vmatpush1.msra.mxu0 0.0
    %402 = vmatprep.subr.mxu0 0.0
    %403 = vmatpush1.msra.mxu0 %v52
    %404 = vmatprep.subr.mxu0 0.0
    %405 = vmatpush1.msra.mxu0 %v51
    %406 = vmatprep.subr.mxu0 0.0
    %407 = vmatpush1.msra.mxu0 %v50
    %408 = vmatprep.subr.mxu0 0.0
    %409 = vmatpush1.msra.mxu0 %v49
    %410 = vmatprep.subr.mxu0 0.0
    %411 = vmatpush2.msra.mxu0 0.0
    %412 = vmatprep.subr.mxu0 0.0
    %413 = vmatpush2.msra.mxu0 0.0
    %414 = vmatprep.subr.mxu0 0.0
    %415 = vmatpush2.msra.mxu0 0.0
    %416 = vmatprep.subr.mxu0 0.0
    %417 = vmatpush2.msra.mxu0 0.0
    %418 = vmatprep.subr.mxu0 0.0
    %419 = vmatpush2.msra.mxu0 0.0
    %420 = vmatprep.subr.mxu0 0.0
    %421 = vmatpush2.msra.mxu0 0.0
    %422 = vmatprep.subr.mxu0 0.0
    %423 = vmatpush2.msra.mxu0 0.0
    %424 = vmatprep.subr.mxu0 0.0
    %425 = vmatpush2.msra.mxu0 0.0
    %426 = vmatprep.subr.mxu0 0.0
    %427 = vmatpush2.msra.mxu0 0.0
    %428 = vmatprep.subr.mxu0 0.0
    %429 = vmatpush2.msra.mxu0 0.0
    %430 = vmatprep.subr.mxu0 0.0
    %431 = vmatpush2.msra.mxu0 0.0
    %432 = vmatprep.subr.mxu0 0.0
    %433 = vmatpush2.msra.mxu0 0.0
    %434 = vmatprep.subr.mxu0 0.0
    %435 = vmatpush2.msra.mxu0 0.0
    %436 = vmatprep.subr.mxu0 0.0
    %437 = vmatpush2.msra.mxu0 0.0
    %438 = vmatprep.subr.mxu0 0.0
    %439 = vmatpush2.msra.mxu0 0.0
    %440 = vmatprep.subr.mxu0 0.0
    %441 = vmatpush2.msra.mxu0 0.0
    %442 = vmatprep.mubr.f32.mxu0 0.0
    %443 = vmatmul.mubr.f32.gmra.mxu0 %v376
    %v444 = vpop.f32.mrf.mxu0
    %v445 = vadd.f32 %v60, %v444
    %v446 = vpop.f32.mrf.mxu0
    %447 = vdwg.mxu0
    %v448 = vadd.f32 %v372, %v445
    %v449 = vxor.u32 %v448, 2147483648
    %v450 = vmul.f32 %v449, 1.442695
    %v451 = vpow.pop %v450
    %v452 = vadd.f32 %v451, 1.0
    %v453 = vrcp.pop %v452
    %v454 = vmul.f32 1.0, %v453
    %456 = vrot.lane.b32.xlu0 %v445, 64
    %v457 = vpop.permute.xlu0 %456
    %v459 = vmul.f32 %v454, %v457
    %461 = vrot.lane.b32.xlu0 %v459, 64
    %v462 = vpop.permute.xlu0 %461
    %v464 = vadd.f32 %v372, %v462
    %v465 = vtanh.pop %v464
    %v466 = vsub.f32 1.0, %v454
    %468 = vrot.lane.b32.xlu0 %v465, 96
    %v469 = vpop.permute.xlu0 %468
    %v471 = vmul.f32 %v466, %v469
    %v472 = vmul.f32 %v454, %v370
    %v473 = vadd.f32 %v471, %v472
    %s474 = scalar_lea.vmem [#allocation3], 32
    %v475 = vld [vmem:[%s474] sm:$0xff]
    %477 = vrot.lane.b32.xlu0 %v473, 96
    %v478 = vpop.permute.xlu0 %477
    %v479 = vsel %vm62, %v478, 0
    %481 = vmatprep.subr.mxu0 0.0
    %482 = vmatpush1.msra.mxu0 0.0
    %483 = vmatprep.subr.mxu0 0.0
    %484 = vmatpush1.msra.mxu0 0.0
    %485 = vmatprep.subr.mxu0 0.0
    %486 = vmatpush1.msra.mxu0 0.0
    %487 = vmatprep.subr.mxu0 0.0
    %488 = vmatpush1.msra.mxu0 0.0
    %489 = vmatprep.subr.mxu0 0.0
    %490 = vmatpush1.msra.mxu0 0.0
    %491 = vmatprep.subr.mxu0 0.0
    %492 = vmatpush1.msra.mxu0 0.0
    %493 = vmatprep.subr.mxu0 0.0
    %494 = vmatpush1.msra.mxu0 0.0
    %495 = vmatprep.subr.mxu0 0.0
    %496 = vmatpush1.msra.mxu0 0.0
    %497 = vmatprep.subr.mxu0 0.0
    %498 = vmatpush1.msra.mxu0 0.0
    %499 = vmatprep.subr.mxu0 0.0
    %500 = vmatpush1.msra.mxu0 0.0
    %501 = vmatprep.subr.mxu0 0.0
    %502 = vmatpush1.msra.mxu0 0.0
    %503 = vmatprep.subr.mxu0 0.0
    %504 = vmatpush1.msra.mxu0 0.0
    %505 = vmatprep.subr.mxu0 0.0
    %506 = vmatpush1.msra.mxu0 %v52
    %507 = vmatprep.subr.mxu0 0.0
    %508 = vmatpush1.msra.mxu0 %v51
    %509 = vmatprep.subr.mxu0 0.0
    %510 = vmatpush1.msra.mxu0 %v50
    %511 = vmatprep.subr.mxu0 0.0
    %512 = vmatpush1.msra.mxu0 %v49
    %513 = vmatprep.subr.mxu0 0.0
    %514 = vmatpush2.msra.mxu0 0.0
    %515 = vmatprep.subr.mxu0 0.0
    %516 = vmatpush2.msra.mxu0 0.0
    %517 = vmatprep.subr.mxu0 0.0
    %518 = vmatpush2.msra.mxu0 0.0
    %519 = vmatprep.subr.mxu0 0.0
    %520 = vmatpush2.msra.mxu0 0.0
    %521 = vmatprep.subr.mxu0 0.0
    %522 = vmatpush2.msra.mxu0 0.0
    %523 = vmatprep.subr.mxu0 0.0
    %524 = vmatpush2.msra.mxu0 0.0
    %525 = vmatprep.subr.mxu0 0.0
    %526 = vmatpush2.msra.mxu0 0.0
    %527 = vmatprep.subr.mxu0 0.0
    %528 = vmatpush2.msra.mxu0 0.0
    %529 = vmatprep.subr.mxu0 0.0
    %530 = vmatpush2.msra.mxu0 0.0
    %531 = vmatprep.subr.mxu0 0.0
    %532 = vmatpush2.msra.mxu0 0.0
    %533 = vmatprep.subr.mxu0 0.0
    %534 = vmatpush2.msra.mxu0 0.0
    %535 = vmatprep.subr.mxu0 0.0
    %536 = vmatpush2.msra.mxu0 0.0
    %537 = vmatprep.subr.mxu0 0.0
    %538 = vmatpush2.msra.mxu0 0.0
    %539 = vmatprep.subr.mxu0 0.0
    %540 = vmatpush2.msra.mxu0 0.0
    %541 = vmatprep.subr.mxu0 0.0
    %542 = vmatpush2.msra.mxu0 0.0
    %543 = vmatprep.subr.mxu0 0.0
    %544 = vmatpush2.msra.mxu0 0.0
    %545 = vmatprep.mubr.f32.mxu0 0.0
    %546 = vmatmul.mubr.f32.gmra.mxu0 %v479
    %v547 = vpop.f32.mrf.mxu0
    %v548 = vadd.f32 %v60, %v547
    %v549 = vpop.f32.mrf.mxu0
    %550 = vdwg.mxu0
    %v551 = vadd.f32 %v475, %v548
    %v552 = vxor.u32 %v551, 2147483648
    %v553 = vmul.f32 %v552, 1.442695
    %v554 = vpow.pop %v553
    %v555 = vadd.f32 %v554, 1.0
    %v556 = vrcp.pop %v555
    %v557 = vmul.f32 1.0, %v556
    %559 = vrot.lane.b32.xlu0 %v548, 64
    %v560 = vpop.permute.xlu0 %559
    %v562 = vmul.f32 %v557, %v560
    %564 = vrot.lane.b32.xlu0 %v562, 64
    %v565 = vpop.permute.xlu0 %564
    %v567 = vadd.f32 %v475, %v565
    %v568 = vtanh.pop %v567
    %v569 = vsub.f32 1.0, %v557
    %571 = vrot.lane.b32.xlu0 %v568, 96
    %v572 = vpop.permute.xlu0 %571
    %v574 = vmul.f32 %v569, %v572
    %v575 = vmul.f32 %v557, %v473
    %v576 = vadd.f32 %v574, %v575
    %s577 = scalar_lea.vmem [#allocation3], 40
    %v578 = vld [vmem:[%s577] sm:$0xff]
    %580 = vrot.lane.b32.xlu0 %v576, 96
    %v581 = vpop.permute.xlu0 %580
    %v582 = vsel %vm62, %v581, 0
    %584 = vmatprep.subr.mxu0 0.0
    %585 = vmatpush1.msra.mxu0 0.0
    %586 = vmatprep.subr.mxu0 0.0
    %587 = vmatpush1.msra.mxu0 0.0
    %588 = vmatprep.subr.mxu0 0.0
    %589 = vmatpush1.msra.mxu0 0.0
    %590 = vmatprep.subr.mxu0 0.0
    %591 = vmatpush1.msra.mxu0 0.0
    %592 = vmatprep.subr.mxu0 0.0
    %593 = vmatpush1.msra.mxu0 0.0
    %594 = vmatprep.subr.mxu0 0.0
    %595 = vmatpush1.msra.mxu0 0.0
    %596 = vmatprep.subr.mxu0 0.0
    %597 = vmatpush1.msra.mxu0 0.0
    %598 = vmatprep.subr.mxu0 0.0
    %599 = vmatpush1.msra.mxu0 0.0
    %600 = vmatprep.subr.mxu0 0.0
    %601 = vmatpush1.msra.mxu0 0.0
    %602 = vmatprep.subr.mxu0 0.0
    %603 = vmatpush1.msra.mxu0 0.0
    %604 = vmatprep.subr.mxu0 0.0
    %605 = vmatpush1.msra.mxu0 0.0
    %606 = vmatprep.subr.mxu0 0.0
    %607 = vmatpush1.msra.mxu0 0.0
    %608 = vmatprep.subr.mxu0 0.0
    %609 = vmatpush1.msra.mxu0 %v52
    %610 = vmatprep.subr.mxu0 0.0
    %611 = vmatpush1.msra.mxu0 %v51
    %612 = vmatprep.subr.mxu0 0.0
    %613 = vmatpush1.msra.mxu0 %v50
    %614 = vmatprep.subr.mxu0 0.0
    %615 = vmatpush1.msra.mxu0 %v49
    %616 = vmatprep.subr.mxu0 0.0
    %617 = vmatpush2.msra.mxu0 0.0
    %618 = vmatprep.subr.mxu0 0.0
    %619 = vmatpush2.msra.mxu0 0.0
    %620 = vmatprep.subr.mxu0 0.0
    %621 = vmatpush2.msra.mxu0 0.0
    %622 = vmatprep.subr.mxu0 0.0
    %623 = vmatpush2.msra.mxu0 0.0
    %624 = vmatprep.subr.mxu0 0.0
    %625 = vmatpush2.msra.mxu0 0.0
    %626 = vmatprep.subr.mxu0 0.0
    %627 = vmatpush2.msra.mxu0 0.0
    %628 = vmatprep.subr.mxu0 0.0
    %629 = vmatpush2.msra.mxu0 0.0
    %630 = vmatprep.subr.mxu0 0.0
    %631 = vmatpush2.msra.mxu0 0.0
    %632 = vmatprep.subr.mxu0 0.0
    %633 = vmatpush2.msra.mxu0 0.0
    %634 = vmatprep.subr.mxu0 0.0
    %635 = vmatpush2.msra.mxu0 0.0
    %636 = vmatprep.subr.mxu0 0.0
    %637 = vmatpush2.msra.mxu0 0.0
    %638 = vmatprep.subr.mxu0 0.0
    %639 = vmatpush2.msra.mxu0 0.0
    %640 = vmatprep.subr.mxu0 0.0
    %641 = vmatpush2.msra.mxu0 0.0
    %642 = vmatprep.subr.mxu0 0.0
    %643 = vmatpush2.msra.mxu0 0.0
    %644 = vmatprep.subr.mxu0 0.0
    %645 = vmatpush2.msra.mxu0 0.0
    %646 = vmatprep.subr.mxu0 0.0
    %647 = vmatpush2.msra.mxu0 0.0
    %648 = vmatprep.mubr.f32.mxu0 0.0
    %649 = vmatmul.mubr.f32.gmra.mxu0 %v582
    %v650 = vpop.f32.mrf.mxu0
    %v651 = vadd.f32 %v60, %v650
    %v652 = vpop.f32.mrf.mxu0
    %653 = vdwg.mxu0
    %v654 = vadd.f32 %v578, %v651
    %v655 = vxor.u32 %v654, 2147483648
    %v656 = vmul.f32 %v655, 1.442695
    %v657 = vpow.pop %v656
    %v658 = vadd.f32 %v657, 1.0
    %v659 = vrcp.pop %v658
    %v660 = vmul.f32 1.0, %v659
    %662 = vrot.lane.b32.xlu0 %v651, 64
    %v663 = vpop.permute.xlu0 %662
    %v665 = vmul.f32 %v660, %v663
    %667 = vrot.lane.b32.xlu0 %v665, 64
    %v668 = vpop.permute.xlu0 %667
    %v670 = vadd.f32 %v578, %v668
    %v671 = vtanh.pop %v670
    %v672 = vsub.f32 1.0, %v660
    %674 = vrot.lane.b32.xlu0 %v671, 96
    %v675 = vpop.permute.xlu0 %674
    %v677 = vmul.f32 %v672, %v675
    %v678 = vmul.f32 %v660, %v576
    %v679 = vadd.f32 %v677, %v678
    %s680 = scalar_lea.vmem [#allocation3], 48
    %v681 = vld [vmem:[%s680] sm:$0xff]
    %683 = vrot.lane.b32.xlu0 %v679, 96
    %v684 = vpop.permute.xlu0 %683
    %v685 = vsel %vm62, %v684, 0
    %687 = vmatprep.subr.mxu0 0.0
    %688 = vmatpush1.msra.mxu0 0.0
    %689 = vmatprep.subr.mxu0 0.0
    %690 = vmatpush1.msra.mxu0 0.0
    %691 = vmatprep.subr.mxu0 0.0
    %692 = vmatpush1.msra.mxu0 0.0
    %693 = vmatprep.subr.mxu0 0.0
    %694 = vmatpush1.msra.mxu0 0.0
    %695 = vmatprep.subr.mxu0 0.0
    %696 = vmatpush1.msra.mxu0 0.0
    %697 = vmatprep.subr.mxu0 0.0
    %698 = vmatpush1.msra.mxu0 0.0
    %699 = vmatprep.subr.mxu0 0.0
    %700 = vmatpush1.msra.mxu0 0.0
    %701 = vmatprep.subr.mxu0 0.0
    %702 = vmatpush1.msra.mxu0 0.0
    %703 = vmatprep.subr.mxu0 0.0
    %704 = vmatpush1.msra.mxu0 0.0
    %705 = vmatprep.subr.mxu0 0.0
    %706 = vmatpush1.msra.mxu0 0.0
    %707 = vmatprep.subr.mxu0 0.0
    %708 = vmatpush1.msra.mxu0 0.0
    %709 = vmatprep.subr.mxu0 0.0
    %710 = vmatpush1.msra.mxu0 0.0
    %711 = vmatprep.subr.mxu0 0.0
    %712 = vmatpush1.msra.mxu0 %v52
    %713 = vmatprep.subr.mxu0 0.0
    %714 = vmatpush1.msra.mxu0 %v51
    %715 = vmatprep.subr.mxu0 0.0
    %716 = vmatpush1.msra.mxu0 %v50
    %717 = vmatprep.subr.mxu0 0.0
    %718 = vmatpush1.msra.mxu0 %v49
    %719 = vmatprep.subr.mxu0 0.0
    %720 = vmatpush2.msra.mxu0 0.0
    %721 = vmatprep.subr.mxu0 0.0
    %722 = vmatpush2.msra.mxu0 0.0
    %723 = vmatprep.subr.mxu0 0.0
    %724 = vmatpush2.msra.mxu0 0.0
    %725 = vmatprep.subr.mxu0 0.0
    %726 = vmatpush2.msra.mxu0 0.0
    %727 = vmatprep.subr.mxu0 0.0
    %728 = vmatpush2.msra.mxu0 0.0
    %729 = vmatprep.subr.mxu0 0.0
    %730 = vmatpush2.msra.mxu0 0.0
    %731 = vmatprep.subr.mxu0 0.0
    %732 = vmatpush2.msra.mxu0 0.0
    %733 = vmatprep.subr.mxu0 0.0
    %734 = vmatpush2.msra.mxu0 0.0
    %735 = vmatprep.subr.mxu0 0.0
    %736 = vmatpush2.msra.mxu0 0.0
    %737 = vmatprep.subr.mxu0 0.0
    %738 = vmatpush2.msra.mxu0 0.0
    %739 = vmatprep.subr.mxu0 0.0
    %740 = vmatpush2.msra.mxu0 0.0
    %741 = vmatprep.subr.mxu0 0.0
    %742 = vmatpush2.msra.mxu0 0.0
    %743 = vmatprep.subr.mxu0 0.0
    %744 = vmatpush2.msra.mxu0 0.0
    %745 = vmatprep.subr.mxu0 0.0
    %746 = vmatpush2.msra.mxu0 0.0
    %747 = vmatprep.subr.mxu0 0.0
    %748 = vmatpush2.msra.mxu0 0.0
    %749 = vmatprep.subr.mxu0 0.0
    %750 = vmatpush2.msra.mxu0 0.0
    %751 = vmatprep.mubr.f32.mxu0 0.0
    %752 = vmatmul.mubr.f32.gmra.mxu0 %v685
    %v753 = vpop.f32.mrf.mxu0
    %v754 = vadd.f32 %v60, %v753
    %v755 = vpop.f32.mrf.mxu0
    %756 = vdwg.mxu0
    %v757 = vadd.f32 %v681, %v754
    %v758 = vxor.u32 %v757, 2147483648
    %v759 = vmul.f32 %v758, 1.442695
    %v760 = vpow.pop %v759
    %v761 = vadd.f32 %v760, 1.0
    %v762 = vrcp.pop %v761
    %v763 = vmul.f32 1.0, %v762
    %765 = vrot.lane.b32.xlu0 %v754, 64
    %v766 = vpop.permute.xlu0 %765
    %v768 = vmul.f32 %v763, %v766
    %770 = vrot.lane.b32.xlu0 %v768, 64
    %v771 = vpop.permute.xlu0 %770
    %v773 = vadd.f32 %v681, %v771
    %v774 = vtanh.pop %v773
    %v775 = vsub.f32 1.0, %v763
    %777 = vrot.lane.b32.xlu0 %v774, 96
    %v778 = vpop.permute.xlu0 %777
    %v780 = vmul.f32 %v775, %v778
    %v781 = vmul.f32 %v763, %v679
    %v782 = vadd.f32 %v780, %v781
    %s783 = scalar_lea.vmem [#allocation3], 56
    %v784 = vld [vmem:[%s783] sm:$0xff]
    %786 = vrot.lane.b32.xlu0 %v782, 96
    %v787 = vpop.permute.xlu0 %786
    %v788 = vsel %vm62, %v787, 0
    %790 = vmatprep.subr.mxu0 0.0
    %791 = vmatpush1.msra.mxu0 0.0
    %792 = vmatprep.subr.mxu0 0.0
    %793 = vmatpush1.msra.mxu0 0.0
    %794 = vmatprep.subr.mxu0 0.0
    %795 = vmatpush1.msra.mxu0 0.0
    %796 = vmatprep.subr.mxu0 0.0
    %797 = vmatpush1.msra.mxu0 0.0
    %798 = vmatprep.subr.mxu0 0.0
    %799 = vmatpush1.msra.mxu0 0.0
    %800 = vmatprep.subr.mxu0 0.0
    %801 = vmatpush1.msra.mxu0 0.0
    %802 = vmatprep.subr.mxu0 0.0
    %803 = vmatpush1.msra.mxu0 0.0
    %804 = vmatprep.subr.mxu0 0.0
    %805 = vmatpush1.msra.mxu0 0.0
    %806 = vmatprep.subr.mxu0 0.0
    %807 = vmatpush1.msra.mxu0 0.0
    %808 = vmatprep.subr.mxu0 0.0
    %809 = vmatpush1.msra.mxu0 0.0
    %810 = vmatprep.subr.mxu0 0.0
    %811 = vmatpush1.msra.mxu0 0.0
    %812 = vmatprep.subr.mxu0 0.0
    %813 = vmatpush1.msra.mxu0 0.0
    %814 = vmatprep.subr.mxu0 0.0
    %815 = vmatpush1.msra.mxu0 %v52
    %816 = vmatprep.subr.mxu0 0.0
    %817 = vmatpush1.msra.mxu0 %v51
    %818 = vmatprep.subr.mxu0 0.0
    %819 = vmatpush1.msra.mxu0 %v50
    %820 = vmatprep.subr.mxu0 0.0
    %821 = vmatpush1.msra.mxu0 %v49
    %822 = vmatprep.subr.mxu0 0.0
    %823 = vmatpush2.msra.mxu0 0.0
    %824 = vmatprep.subr.mxu0 0.0
    %825 = vmatpush2.msra.mxu0 0.0
    %826 = vmatprep.subr.mxu0 0.0
    %827 = vmatpush2.msra.mxu0 0.0
    %828 = vmatprep.subr.mxu0 0.0
    %829 = vmatpush2.msra.mxu0 0.0
    %830 = vmatprep.subr.mxu0 0.0
    %831 = vmatpush2.msra.mxu0 0.0
    %832 = vmatprep.subr.mxu0 0.0
    %833 = vmatpush2.msra.mxu0 0.0
    %834 = vmatprep.subr.mxu0 0.0
    %835 = vmatpush2.msra.mxu0 0.0
    %836 = vmatprep.subr.mxu0 0.0
    %837 = vmatpush2.msra.mxu0 0.0
    %838 = vmatprep.subr.mxu0 0.0
    %839 = vmatpush2.msra.mxu0 0.0
    %840 = vmatprep.subr.mxu0 0.0
    %841 = vmatpush2.msra.mxu0 0.0
    %842 = vmatprep.subr.mxu0 0.0
    %843 = vmatpush2.msra.mxu0 0.0
    %844 = vmatprep.subr.mxu0 0.0
    %845 = vmatpush2.msra.mxu0 0.0
    %846 = vmatprep.subr.mxu0 0.0
    %847 = vmatpush2.msra.mxu0 0.0
    %848 = vmatprep.subr.mxu0 0.0
    %849 = vmatpush2.msra.mxu0 0.0
    %850 = vmatprep.subr.mxu0 0.0
    %851 = vmatpush2.msra.mxu0 0.0
    %852 = vmatprep.subr.mxu0 0.0
    %853 = vmatpush2.msra.mxu0 0.0
    %854 = vmatprep.mubr.f32.mxu0 0.0
    %855 = vmatmul.mubr.f32.gmra.mxu0 %v788
    %v856 = vpop.f32.mrf.mxu0
    %v857 = vadd.f32 %v60, %v856
    %v858 = vpop.f32.mrf.mxu0
    %859 = vdwg.mxu0
    %v860 = vadd.f32 %v784, %v857
    %v861 = vxor.u32 %v860, 2147483648
    %v862 = vmul.f32 %v861, 1.442695
    %v863 = vpow.pop %v862
    %v864 = vadd.f32 %v863, 1.0
    %v865 = vrcp.pop %v864
    %v866 = vmul.f32 1.0, %v865
    %868 = vrot.lane.b32.xlu0 %v857, 64
    %v869 = vpop.permute.xlu0 %868
    %v871 = vmul.f32 %v866, %v869
    %873 = vrot.lane.b32.xlu0 %v871, 64
    %v874 = vpop.permute.xlu0 %873
    %v876 = vadd.f32 %v784, %v874
    %v877 = vtanh.pop %v876
    %v878 = vsub.f32 1.0, %v866
    %880 = vrot.lane.b32.xlu0 %v877, 96
    %v881 = vpop.permute.xlu0 %880
    %v883 = vmul.f32 %v878, %v881
    %v884 = vmul.f32 %v866, %v782
    %v885 = vadd.f32 %v883, %v884
    %887 = vrot.lane.b32.xlu0 %v885, 96
    %v888 = vpop.permute.xlu0 %887
    %890 = vst.msk [vmem:[#allocation2] sm:$0xff] %vm62, %v888
    // Predicated region
    $region26: #{tpu_custom_call.1} parent=1 // pred_check
      %p891 = pneg %p43
    $region27: #{tpu_custom_call.1} parent=1 // pred_check_branch
      %893 = sbr.rel (%p891) target = $region29
    $region28: #{tpu_custom_call.1} parent=1 // pred_region
      %894 = vst.msk [vmem:[#allocation8] sm:$0xff] %vm62, %v888
    $region29: #{tpu_custom_call.1} parent=1 // pred_fallthru
      _
    // Predicated region
    $region30: #{tpu_custom_call.1} parent=1 // pred_check
      _
    $region31: #{tpu_custom_call.1} parent=1 // pred_check_branch
      %896 = sbr.rel (0) target = $region33
    $region32: #{tpu_custom_call.1} parent=1 // pred_region
      %s898 = ssub.s32 128, 128
      %899 = vsyncadd [#allocation5], %s898
      %s901 = sshll.u32 [#allocation8], 4
      %s902 = int_to_ptr.vmem [resolvable:$true] %s901
      %904 = dma.vmem_to_hbm [thread:$0]  %s902, 128, %s3, [#allocation5]
    $region33: #{tpu_custom_call.1} parent=1 // pred_fallthru
      _
    // Predicated region
    $region34: #{tpu_custom_call.1} parent=1 // pred_check
      _
    $region35: #{tpu_custom_call.1} parent=1 // pred_check_branch
      %906 = sbr.rel (0) target = $region37
    $region36: #{tpu_custom_call.1} parent=1 // pred_region
      %907 = dma.done [#allocation5], 128
    $region37: #{tpu_custom_call.1} parent=1 // pred_fallthru
      _
    %908 = vsyncpa [#allocation4], 1
    %909 = vsyncpa [#allocation7], 1
    %910 = vsyncpa [#allocation5], 1

</llo_original>
